<compile_context>
chip_gen: v6e
topology: v6e:2x2x1
jax: 0.10.0
libtpu: 0.0.40
codegen_flags: <defaults>
</compile_context>

<pallas_src>
import jax
import jax.numpy as jnp
from jax.experimental import pallas as pl
from jax.experimental.pallas import tpu as pltpu

BF16 = jnp.bfloat16


def _vmem_spec():
    return pl.BlockSpec(memory_space=pltpu.MemorySpace.VMEM)


# Parameter-slab row layout (f32 slab of shape [256, 128], lane dim = 128):
#   rows   0:8    cols 0:32   w1          (GCNConv1 weight, [in=8,  out=32])
#   rows   8:40   cols 0:16   w2'         (GCNConv2 weight with BatchNorm folded in)
#   rows  40:56   cols 0:34   Wc1[0:16]   (fused classifier layer-1 weight, node0 half)
#   rows  56:72   cols 0:34   Wc1[16:32]  (fused classifier layer-1 weight, node1 half)
#   row   72      cols 0:32   b1
#   row   73      cols 0:16   b2'         (BN-folded bias)
#   row   74      cols 0:34   bc1 = [bt1|bm1|bl]
#   row   75      cols 0:128  b2aug       (only cols 0:8 nonzero: [0,0, bt2(2), bm2(4)])
#   rows  80:114  cols 0:128  W2aug       (block-diag wt2 (+) wm2, identity link pass-through;
#                                          only cols 0:8 nonzero -> lane-dense logits)
#   rows 128:256  cols 0:128  G           (group-sum matrix: {0,1},{2,3},{4:8}, identity >=8)


# ---------------- Fused Pallas kernel ----------------

def adversarial_fused_kernel(a_ref, x_ref, sa0_ref, sa1_ref, p_ref, o_ref):
    f32 = jnp.float32

    # GCNConv1: relu(A_hat @ (X @ W1) + b1)          (bf16 MXU operands, f32 accumulation)
    w1 = p_ref[0:8, 0:32].astype(BF16)
    t = jnp.dot(x_ref[...], w1, preferred_element_type=f32)                  # [N, 32]
    h = jnp.dot(a_ref[...], t.astype(BF16), preferred_element_type=f32) + p_ref[72:73, 0:32]
    h = jnp.maximum(h, 0.0)
    # TODO(synk): F.dropout(p=0.5) skipped (identity in eval mode; non-deterministic in train).

    # GCNConv2 with BatchNorm1d(16) folded into W2'/b2'.  The 2nd aggregation + edge gather are
    # folded: n_k = (A_hat[ids_k] @ (h @ W2')) + b2'  — SA rows are gathered in the wrapper.
    w2 = p_ref[8:40, 0:16].astype(BF16)
    g2 = jnp.dot(h.astype(BF16), w2, preferred_element_type=f32)             # [N, 16]
    g2b = g2.astype(BF16)
    b2 = p_ref[73:74, 0:16]
    n0 = jnp.dot(sa0_ref[...], g2b, preferred_element_type=f32) + b2         # [E, 16]
    n1 = jnp.dot(sa1_ref[...], g2b, preferred_element_type=f32) + b2         # [E, 16]

    # Fused classifier layer 1: concat(n0, n1) @ [wt1|wm1|wl] + [bt1|bm1|bl]
    # (split-K over the two node halves, so no lane concat is needed)
    wc1a = p_ref[40:56, 0:34].astype(BF16)
    wc1b = p_ref[56:72, 0:34].astype(BF16)
    h1 = (jnp.dot(n0.astype(BF16), wc1a, preferred_element_type=f32)
          + jnp.dot(n1.astype(BF16), wc1b, preferred_element_type=f32)
          + p_ref[74:75, 0:34])                                              # [E, 34]

    # ReLU only on the two hidden heads (cols 0:32); link logits (cols 32:34) pass through.
    col34 = jax.lax.broadcasted_iota(jnp.int32, h1.shape, 1)
    h1 = jnp.where(col34 < 32, jnp.maximum(h1, 0.0), h1)

    # Fused classifier layer 2 at lane width 128 (only cols 0:8 are real) -> lane-dense store.
    w2aug = p_ref[80:114, :].astype(BF16)
    logits = (jnp.dot(h1.astype(BF16), w2aug, preferred_element_type=f32)
              + p_ref[75:76, :])                                             # [E, 128]

    # Grouped softmax over column groups {0:2}=link, {2:4}=type, {4:8}=modality.
    # Per-group maxima (robust even if one head's logits dominate another's).
    col = jax.lax.broadcasted_iota(jnp.int32, logits.shape, 1)
    neg = jnp.full_like(logits, -jnp.inf)
    m_link = jnp.max(jnp.where(col < 2, logits, neg), axis=1, keepdims=True)
    m_type = jnp.max(jnp.where((col >= 2) & (col < 4), logits, neg), axis=1, keepdims=True)
    m_mod = jnp.max(jnp.where((col >= 4) & (col < 8), logits, neg), axis=1, keepdims=True)
    gmax = jnp.where(col < 2, m_link,
                     jnp.where(col < 4, m_type,
                               jnp.where(col < 8, m_mod, jnp.zeros_like(logits))))
    ez = jnp.exp(logits - gmax)
    # Group sums via one tiny f32 matmul (MXU slot); cols >= 8 are identity so gsum there = ez.
    gsum = jnp.dot(ez, p_ref[128:256, :], preferred_element_type=f32)        # [E, 128]
    o_ref[...] = ez / gsum


# ---------------- Plain-JAX glue (hoisted, per-graph / per-params) ----------------

def build_gcn_adjacency(edge_index, num_nodes):
    """A_hat = D^{-1/2}(A + I)D^{-1/2}.  Runs once per graph (hoisted)."""
    src, dst = edge_index[0], edge_index[1]
    a = jnp.zeros((num_nodes, num_nodes), jnp.float32).at[dst, src].add(1.0)  # A[i,j]=#edges j->i
    a = a + jnp.eye(num_nodes, dtype=jnp.float32)                             # add self loops
    deg = jnp.sum(a, axis=1)
    dinv = jnp.where(deg > 0, 1.0 / jnp.sqrt(deg), 0.0)
    return a * dinv[:, None] * dinv[None, :]


def pack_params(params):
    """Pack all weights/biases (BN folded, classifier heads fused) into one f32 slab.  Runs once."""
    eps = 1e-5
    scale = params["bn_gamma"] / jnp.sqrt(params["bn_var"] + eps)
    shift = params["bn_beta"] - params["bn_mean"] * scale
    w2f = params["w2"] * scale[None, :]          # column scaling commutes with A_hat left-mult
    b2f = params["b2"] * scale + shift

    # Fused classifier layer-1: columns 0:16 type-hidden, 16:32 modality-hidden, 32:34 link logits
    wc1 = jnp.concatenate([params["wt1"], params["wm1"], params["wl"]], axis=1)   # [32, 34]
    bc1 = jnp.concatenate([params["bt1"], params["bm1"], params["bl"]], axis=0)   # [34]

    # Fused classifier layer-2 at lane width 128: block-diag + identity link pass-through.
    w2aug = jnp.zeros((34, 128), jnp.float32)
    w2aug = w2aug.at[0:16, 2:4].set(params["wt2"])
    w2aug = w2aug.at[16:32, 4:8].set(params["wm2"])
    w2aug = w2aug.at[32:34, 0:2].set(jnp.eye(2, dtype=jnp.float32))
    b2aug = jnp.zeros((128,), jnp.float32)
    b2aug = b2aug.at[2:4].set(params["bt2"])
    b2aug = b2aug.at[4:8].set(params["bm2"])

    # Group-sum matrix for the grouped softmax (identity for the padded lanes >= 8).
    g = jnp.zeros((128, 128), jnp.float32)
    g = g.at[0:2, 0:2].set(1.0)
    g = g.at[2:4, 2:4].set(1.0)
    g = g.at[4:8, 4:8].set(1.0)
    idx = jnp.arange(8, 128)
    g = g.at[idx, idx].set(1.0)

    slab = jnp.zeros((256, 128), jnp.float32)
    slab = slab.at[0:8, 0:32].set(params["w1"])
    slab = slab.at[8:40, 0:16].set(w2f)
    slab = slab.at[40:72, 0:34].set(wc1)
    slab = slab.at[72, 0:32].set(params["b1"])
    slab = slab.at[73, 0:16].set(b2f)
    slab = slab.at[74, 0:34].set(bc1)
    slab = slab.at[75, :].set(b2aug)
    slab = slab.at[80:114, :].set(w2aug)
    slab = slab.at[128:256, :].set(g)
    return slab


def prepare(params, edge_index, num_nodes):
    """Per-graph / per-params preprocessing.  Call once and reuse across forward() calls."""
    return build_gcn_adjacency(edge_index, num_nodes), pack_params(params)


# ---------------- Per-step apply (jitted) ----------------

@jax.jit
def adversarial_apply(a_hat, slab, x, edges):
    e = edges.shape[0]
    e_pad = max(8, -(-e // 8) * 8)                 # sublane-aligned edge count

    ids0 = edges[:, 0]
    ids1 = edges[:, 1]
    pad = e_pad - e
    if pad:
        ids0 = jnp.concatenate([ids0, jnp.zeros((pad,), ids0.dtype)])
        ids1 = jnp.concatenate([ids1, jnp.zeros((pad,), ids1.dtype)])

    a_bf = a_hat.astype(BF16)
    sa0 = a_bf[ids0, :]                            # gathered A_hat rows (edge endpoint 0)
    sa1 = a_bf[ids1, :]                            # gathered A_hat rows (edge endpoint 1)

    out = pl.pallas_call(
        adversarial_fused_kernel,
        out_shape=jax.ShapeDtypeStruct((e_pad, 128), jnp.float32),
        in_specs=[_vmem_spec()] * 5,
        out_specs=_vmem_spec(),
        compiler_params=pltpu.CompilerParams(vmem_limit_bytes=32 * 1024 * 1024),
    )(a_bf, x.astype(BF16), sa0, sa1, slab)

    # Output columns: 0:2 link softmax, 2:4 type softmax, 4:8 modality softmax.
    return out[:e, 0:2], out[:e, 2:4], out[:e, 4:8]


def adversarial_forward(params, x, edge_index, edges, coeff=1.0):
    # coeff only affects the backward pass of GradReverse; forward is identity.
    del coeff
    a_hat, slab = prepare(params, edge_index, x.shape[0])
    return adversarial_apply(a_hat, slab, x, edges)


# ---------------- Pure-JAX reference (for correctness check) ----------------

def reference_forward(params, x, edge_index, edges):
    hp = jax.lax.Precision.HIGHEST
    a_hat = build_gcn_adjacency(edge_index, x.shape[0])
    h = jnp.maximum(jnp.dot(a_hat, jnp.dot(x, params["w1"], precision=hp), precision=hp)
                    + params["b1"], 0.0)
    h = jnp.dot(a_hat, jnp.dot(h, params["w2"], precision=hp), precision=hp) + params["b2"]
    eps = 1e-5
    scale = params["bn_gamma"] / jnp.sqrt(params["bn_var"] + eps)
    h = (h - params["bn_mean"]) * scale + params["bn_beta"]
    ef = jnp.concatenate([h[edges[:, 0]], h[edges[:, 1]]], axis=1)
    sm = lambda z: jax.nn.softmax(z, axis=1)
    link = sm(jnp.dot(ef, params["wl"], precision=hp) + params["bl"])
    t = jnp.maximum(jnp.dot(ef, params["wt1"], precision=hp) + params["bt1"], 0.0)
    typ = sm(jnp.dot(t, params["wt2"], precision=hp) + params["bt2"])
    m = jnp.maximum(jnp.dot(ef, params["wm1"], precision=hp) + params["bm1"], 0.0)
    mod = sm(jnp.dot(m, params["wm2"], precision=hp) + params["bm2"])
    return link, typ, mod


def init_params(key):
    ks = jax.random.split(key, 10)
    s = 0.1
    return {
        # GCNConv(8, 32) / GCNConv(32, 16), stored as [in, out]
        "w1": jax.random.normal(ks[0], (8, 32), jnp.float32) * s,
        "b1": jax.random.normal(ks[1], (32,), jnp.float32) * s,
        "w2": jax.random.normal(ks[2], (32, 16), jnp.float32) * s,
        "b2": jax.random.normal(ks[3], (16,), jnp.float32) * s,
        # BatchNorm1d(16) default init (eval mode)
        "bn_gamma": jnp.ones((16,), jnp.float32),
        "bn_beta": jnp.zeros((16,), jnp.float32),
        "bn_mean": jnp.zeros((16,), jnp.float32),
        "bn_var": jnp.ones((16,), jnp.float32),
        # link_classifier: Linear(32, 2)
        "wl": jax.random.normal(ks[4], (32, 2), jnp.float32) * s,
        "bl": jnp.zeros((2,), jnp.float32),
        # type_classifier: Linear(32,16), Linear(16,2)
        "wt1": jax.random.normal(ks[5], (32, 16), jnp.float32) * s,
        "bt1": jnp.zeros((16,), jnp.float32),
        "wt2": jax.random.normal(ks[6], (16, 2), jnp.float32) * s,
        "bt2": jnp.zeros((2,), jnp.float32),
        # modality_classifier: Linear(32,16), Linear(16,4)
        "wm1": jax.random.normal(ks[7], (32, 16), jnp.float32) * s,
        "bm1": jnp.zeros((16,), jnp.float32),
        "wm2": jax.random.normal(ks[8], (16, 4), jnp.float32) * s,
        "bm2": jnp.zeros((4,), jnp.float32),
    }


if __name__ == "__main__":
    key = jax.random.PRNGKey(0)
    k_x, k_p, k_e = jax.random.split(key, 3)

    N = 16            # number of graph nodes
    E = 8             # number of query edges fed to the classifiers
    x = jax.random.normal(k_x, (N, 8), jnp.float32)          # gcn_data.x

    # undirected ring graph as gcn_data.edge_index -> shape [2, 2N]
    src = jnp.arange(N, dtype=jnp.int32)
    dst = (src + 1) % N
    edge_index = jnp.concatenate(
        [jnp.stack([src, dst], axis=0), jnp.stack([dst, src], axis=0)], axis=1)

    # query edges [E, 2] of node indices (the `edges` argument)
    edges = jax.random.randint(k_e, (E, 2), 0, N, dtype=jnp.int32)

    params = init_params(k_p)

    # Hoisted per-graph / per-params preprocessing (built once, reused every step).
    a_hat, slab = prepare(params, edge_index, N)
    jax.block_until_ready((a_hat, slab))

    link_out, type_out, mod_out = adversarial_apply(a_hat, slab, x, edges)
    jax.block_until_ready((link_out, type_out, mod_out))

    assert link_out.shape == (E, 2)
    assert type_out.shape == (E, 2)
    assert mod_out.shape == (E, 4)
    # each softmax head should sum to 1 across dim=1
    assert jnp.allclose(jnp.sum(link_out, axis=1), 1.0, atol=1e-4)
    assert jnp.allclose(jnp.sum(type_out, axis=1), 1.0, atol=1e-4)
    assert jnp.allclose(jnp.sum(mod_out, axis=1), 1.0, atol=1e-4)

    # compare against a plain-JAX f32 reference of the unfused module
    # (2e-3 tolerance: kernel uses bf16 MXU operands with f32 accumulation)
    ref_link, ref_type, ref_mod = reference_forward(params, x, edge_index, edges)
    assert jnp.allclose(link_out, ref_link, atol=2e-3)
    assert jnp.allclose(type_out, ref_type, atol=2e-3)
    assert jnp.allclose(mod_out, ref_mod, atol=2e-3)

    print("KERNEL_OK")
</pallas_src>

<mosaic_0001>
module attributes {stable_mosaic.version = 11 : i64} {
  func.func @adversarial_fused_kernel(%arg0: memref<16x16xbf16, #tpu.memory_space<vmem>>, %arg1: memref<16x8xbf16, #tpu.memory_space<vmem>>, %arg2: memref<8x16xbf16, #tpu.memory_space<vmem>>, %arg3: memref<8x16xbf16, #tpu.memory_space<vmem>>, %arg4: memref<256x128xf32, #tpu.memory_space<vmem>>, %arg5: memref<8x128xf32, #tpu.memory_space<vmem>>) attributes {dimension_semantics = [], scalar_prefetch = 0 : i64, scratch_operands = 0 : i64, tpu.core_type = #tpu.core_type<tc>} {
    %c0 = arith.constant 0 : index
    %c0_0 = arith.constant 0 : index
    %0 = vector.load %arg4[%c0, %c0_0] : memref<256x128xf32, #tpu.memory_space<vmem>>, vector<8x32xf32>
    %1 = arith.truncf %0 : vector<8x32xf32> to vector<8x32xbf16>
    %c0_1 = arith.constant 0 : index
    %c0_2 = arith.constant 0 : index
    %2 = vector.load %arg1[%c0_1, %c0_2] : memref<16x8xbf16, #tpu.memory_space<vmem>>, vector<16x8xbf16>
    %cst = arith.constant dense<0.000000e+00> : vector<16x32xf32>
    %3 = tpu.matmul %2, %1, %cst {dimension_numbers = #tpu.dot_dimension_numbers<[1], [0], [0], [1], [0, 0, 1, 1], [], []>} : vector<16x8xbf16>, vector<8x32xbf16>, vector<16x32xf32> -> vector<16x32xf32>
    %c0_3 = arith.constant 0 : index
    %c0_4 = arith.constant 0 : index
    %4 = vector.load %arg0[%c0_3, %c0_4] : memref<16x16xbf16, #tpu.memory_space<vmem>>, vector<16x16xbf16>
    %5 = arith.truncf %3 : vector<16x32xf32> to vector<16x32xbf16>
    %cst_5 = arith.constant dense<0.000000e+00> : vector<16x32xf32>
    %6 = tpu.matmul %4, %5, %cst_5 {dimension_numbers = #tpu.dot_dimension_numbers<[1], [0], [0], [1], [0, 0, 1, 1], [], []>} : vector<16x16xbf16>, vector<16x32xbf16>, vector<16x32xf32> -> vector<16x32xf32>
    %c72 = arith.constant 72 : index
    %c0_6 = arith.constant 0 : index
    %7 = vector.load %arg4[%c72, %c0_6] : memref<256x128xf32, #tpu.memory_space<vmem>>, vector<1x32xf32>
    %8 = vector.broadcast %7 : vector<1x32xf32> to vector<16x32xf32>
    %9 = arith.addf %6, %8 : vector<16x32xf32>
    %cst_7 = arith.constant 0.000000e+00 : f32
    %10 = vector.broadcast %cst_7 : f32 to vector<16x32xf32>
    %11 = arith.maximumf %9, %10 : vector<16x32xf32>
    %c8 = arith.constant 8 : index
    %c0_8 = arith.constant 0 : index
    %12 = vector.load %arg4[%c8, %c0_8] : memref<256x128xf32, #tpu.memory_space<vmem>>, vector<32x16xf32>
    %13 = arith.truncf %12 : vector<32x16xf32> to vector<32x16xbf16>
    %14 = arith.truncf %11 : vector<16x32xf32> to vector<16x32xbf16>
    %cst_9 = arith.constant dense<0.000000e+00> : vector<16x16xf32>
    %15 = tpu.matmul %14, %13, %cst_9 {dimension_numbers = #tpu.dot_dimension_numbers<[1], [0], [0], [1], [0, 0, 1, 1], [], []>} : vector<16x32xbf16>, vector<32x16xbf16>, vector<16x16xf32> -> vector<16x16xf32>
    %16 = arith.truncf %15 : vector<16x16xf32> to vector<16x16xbf16>
    %c73 = arith.constant 73 : index
    %c0_10 = arith.constant 0 : index
    %17 = vector.load %arg4[%c73, %c0_10] : memref<256x128xf32, #tpu.memory_space<vmem>>, vector<1x16xf32>
    %c0_11 = arith.constant 0 : index
    %c0_12 = arith.constant 0 : index
    %18 = vector.load %arg2[%c0_11, %c0_12] : memref<8x16xbf16, #tpu.memory_space<vmem>>, vector<8x16xbf16>
    %cst_13 = arith.constant dense<0.000000e+00> : vector<8x16xf32>
    %19 = tpu.matmul %18, %16, %cst_13 {dimension_numbers = #tpu.dot_dimension_numbers<[1], [0], [0], [1], [0, 0, 1, 1], [], []>} : vector<8x16xbf16>, vector<16x16xbf16>, vector<8x16xf32> -> vector<8x16xf32>
    %20 = vector.broadcast %17 : vector<1x16xf32> to vector<8x16xf32>
    %21 = arith.addf %19, %20 : vector<8x16xf32>
    %c0_14 = arith.constant 0 : index
    %c0_15 = arith.constant 0 : index
    %22 = vector.load %arg3[%c0_14, %c0_15] : memref<8x16xbf16, #tpu.memory_space<vmem>>, vector<8x16xbf16>
    %cst_16 = arith.constant dense<0.000000e+00> : vector<8x16xf32>
    %23 = tpu.matmul %22, %16, %cst_16 {dimension_numbers = #tpu.dot_dimension_numbers<[1], [0], [0], [1], [0, 0, 1, 1], [], []>} : vector<8x16xbf16>, vector<16x16xbf16>, vector<8x16xf32> -> vector<8x16xf32>
    %24 = vector.broadcast %17 : vector<1x16xf32> to vector<8x16xf32>
    %25 = arith.addf %23, %24 : vector<8x16xf32>
    %c40 = arith.constant 40 : index
    %c0_17 = arith.constant 0 : index
    %26 = vector.load %arg4[%c40, %c0_17] : memref<256x128xf32, #tpu.memory_space<vmem>>, vector<16x34xf32>
    %27 = arith.truncf %26 : vector<16x34xf32> to vector<16x34xbf16>
    %c56 = arith.constant 56 : index
    %c0_18 = arith.constant 0 : index
    %28 = vector.load %arg4[%c56, %c0_18] : memref<256x128xf32, #tpu.memory_space<vmem>>, vector<16x34xf32>
    %29 = arith.truncf %28 : vector<16x34xf32> to vector<16x34xbf16>
    %30 = arith.truncf %21 : vector<8x16xf32> to vector<8x16xbf16>
    %cst_19 = arith.constant dense<0.000000e+00> : vector<8x34xf32>
    %31 = tpu.matmul %30, %27, %cst_19 {dimension_numbers = #tpu.dot_dimension_numbers<[1], [0], [0], [1], [0, 0, 1, 1], [], []>} : vector<8x16xbf16>, vector<16x34xbf16>, vector<8x34xf32> -> vector<8x34xf32>
    %32 = arith.truncf %25 : vector<8x16xf32> to vector<8x16xbf16>
    %cst_20 = arith.constant dense<0.000000e+00> : vector<8x34xf32>
    %33 = tpu.matmul %32, %29, %cst_20 {dimension_numbers = #tpu.dot_dimension_numbers<[1], [0], [0], [1], [0, 0, 1, 1], [], []>} : vector<8x16xbf16>, vector<16x34xbf16>, vector<8x34xf32> -> vector<8x34xf32>
    %34 = arith.addf %31, %33 : vector<8x34xf32>
    %c74 = arith.constant 74 : index
    %c0_21 = arith.constant 0 : index
    %35 = vector.load %arg4[%c74, %c0_21] : memref<256x128xf32, #tpu.memory_space<vmem>>, vector<1x34xf32>
    %36 = vector.broadcast %35 : vector<1x34xf32> to vector<8x34xf32>
    %37 = arith.addf %34, %36 : vector<8x34xf32>
    %38 = tpu.iota {dimensions = array<i32: 1>} : vector<8x34xi32>
    %c32_i32 = arith.constant 32 : i32
    %39 = vector.broadcast %c32_i32 : i32 to vector<8x34xi32>
    %40 = arith.cmpi slt, %38, %39 : vector<8x34xi32>
    %cst_22 = arith.constant 0.000000e+00 : f32
    %41 = vector.broadcast %cst_22 : f32 to vector<8x34xf32>
    %42 = arith.maximumf %37, %41 : vector<8x34xf32>
    %43 = arith.select %40, %42, %37 : vector<8x34xi1>, vector<8x34xf32>
    %c80 = arith.constant 80 : index
    %c0_23 = arith.constant 0 : index
    %44 = vector.load %arg4[%c80, %c0_23] : memref<256x128xf32, #tpu.memory_space<vmem>>, vector<34x128xf32>
    %45 = arith.truncf %44 : vector<34x128xf32> to vector<34x128xbf16>
    %46 = arith.truncf %43 : vector<8x34xf32> to vector<8x34xbf16>
    %cst_24 = arith.constant dense<0.000000e+00> : vector<8x128xf32>
    %47 = tpu.matmul %46, %45, %cst_24 {dimension_numbers = #tpu.dot_dimension_numbers<[1], [0], [0], [1], [0, 0, 1, 1], [], []>} : vector<8x34xbf16>, vector<34x128xbf16>, vector<8x128xf32> -> vector<8x128xf32>
    %c75 = arith.constant 75 : index
    %c0_25 = arith.constant 0 : index
    %48 = vector.load %arg4[%c75, %c0_25] : memref<256x128xf32, #tpu.memory_space<vmem>>, vector<1x128xf32>
    %49 = vector.broadcast %48 : vector<1x128xf32> to vector<8x128xf32>
    %50 = arith.addf %47, %49 : vector<8x128xf32>
    %51 = tpu.iota {dimensions = array<i32: 1>} : vector<8x128xi32>
    %cst_26 = arith.constant 0xFF800000 : f32
    %52 = vector.broadcast %cst_26 : f32 to vector<8x128xf32>
    %c2_i32 = arith.constant 2 : i32
    %53 = vector.broadcast %c2_i32 : i32 to vector<8x128xi32>
    %54 = arith.cmpi slt, %51, %53 : vector<8x128xi32>
    %55 = arith.select %54, %50, %52 : vector<8x128xi1>, vector<8x128xf32>
    %cst_27 = arith.constant dense<0xFF800000> : vector<8xf32>
    %56 = vector.multi_reduction <maximumf>, %55, %cst_27 [1] : vector<8x128xf32> to vector<8xf32>
    %57 = vector.shape_cast %56 : vector<8xf32> to vector<8x1xf32>
    %c2_i32_28 = arith.constant 2 : i32
    %58 = vector.broadcast %c2_i32_28 : i32 to vector<8x128xi32>
    %59 = arith.cmpi sge, %51, %58 : vector<8x128xi32>
    %c4_i32 = arith.constant 4 : i32
    %60 = vector.broadcast %c4_i32 : i32 to vector<8x128xi32>
    %61 = arith.cmpi slt, %51, %60 : vector<8x128xi32>
    %62 = arith.andi %59, %61 : vector<8x128xi1>
    %63 = arith.select %62, %50, %52 : vector<8x128xi1>, vector<8x128xf32>
    %cst_29 = arith.constant dense<0xFF800000> : vector<8xf32>
    %64 = vector.multi_reduction <maximumf>, %63, %cst_29 [1] : vector<8x128xf32> to vector<8xf32>
    %65 = vector.shape_cast %64 : vector<8xf32> to vector<8x1xf32>
    %c4_i32_30 = arith.constant 4 : i32
    %66 = vector.broadcast %c4_i32_30 : i32 to vector<8x128xi32>
    %67 = arith.cmpi sge, %51, %66 : vector<8x128xi32>
    %c8_i32 = arith.constant 8 : i32
    %68 = vector.broadcast %c8_i32 : i32 to vector<8x128xi32>
    %69 = arith.cmpi slt, %51, %68 : vector<8x128xi32>
    %70 = arith.andi %67, %69 : vector<8x128xi1>
    %71 = arith.select %70, %50, %52 : vector<8x128xi1>, vector<8x128xf32>
    %cst_31 = arith.constant dense<0xFF800000> : vector<8xf32>
    %72 = vector.multi_reduction <maximumf>, %71, %cst_31 [1] : vector<8x128xf32> to vector<8xf32>
    %73 = vector.shape_cast %72 : vector<8xf32> to vector<8x1xf32>
    %c2_i32_32 = arith.constant 2 : i32
    %74 = vector.broadcast %c2_i32_32 : i32 to vector<8x128xi32>
    %75 = arith.cmpi slt, %51, %74 : vector<8x128xi32>
    %c4_i32_33 = arith.constant 4 : i32
    %76 = vector.broadcast %c4_i32_33 : i32 to vector<8x128xi32>
    %77 = arith.cmpi slt, %51, %76 : vector<8x128xi32>
    %c8_i32_34 = arith.constant 8 : i32
    %78 = vector.broadcast %c8_i32_34 : i32 to vector<8x128xi32>
    %79 = arith.cmpi slt, %51, %78 : vector<8x128xi32>
    %cst_35 = arith.constant 0.000000e+00 : f32
    %80 = vector.broadcast %cst_35 : f32 to vector<8x128xf32>
    %81 = vector.shape_cast %73 : vector<8x1xf32> to vector<8x1xf32>
    %82 = vector.broadcast %81 : vector<8x1xf32> to vector<8x128xf32>
    %83 = arith.select %79, %82, %80 : vector<8x128xi1>, vector<8x128xf32>
    %84 = vector.shape_cast %65 : vector<8x1xf32> to vector<8x1xf32>
    %85 = vector.broadcast %84 : vector<8x1xf32> to vector<8x128xf32>
    %86 = arith.select %77, %85, %83 : vector<8x128xi1>, vector<8x128xf32>
    %87 = vector.shape_cast %57 : vector<8x1xf32> to vector<8x1xf32>
    %88 = vector.broadcast %87 : vector<8x1xf32> to vector<8x128xf32>
    %89 = arith.select %75, %88, %86 : vector<8x128xi1>, vector<8x128xf32>
    %90 = arith.subf %50, %89 : vector<8x128xf32>
    %91 = math.exp %90 : vector<8x128xf32>
    %c128 = arith.constant 128 : index
    %c0_36 = arith.constant 0 : index
    %92 = vector.load %arg4[%c128, %c0_36] : memref<256x128xf32, #tpu.memory_space<vmem>>, vector<128x128xf32>
    %cst_37 = arith.constant dense<0.000000e+00> : vector<8x128xf32>
    %93 = tpu.matmul %91, %92, %cst_37 {dimension_numbers = #tpu.dot_dimension_numbers<[1], [0], [0], [1], [0, 0, 1, 1], [], []>} : vector<8x128xf32>, vector<128x128xf32>, vector<8x128xf32> -> vector<8x128xf32>
    %94 = arith.divf %91, %93 : vector<8x128xf32>
    %c0_38 = arith.constant 0 : index
    %c0_39 = arith.constant 0 : index
    %95 = vector.load %arg5[%c0_38, %c0_39] : memref<8x128xf32, #tpu.memory_space<vmem>>, vector<8x128xf32>
    tpu.vector_store %arg5[%c0_38, %c0_39], %94 {strides = array<i32>} : memref<8x128xf32, #tpu.memory_space<vmem>>, vector<8x128xf32>,
    return
  }
}

</mosaic_0001>

<llo_original>
// kernel: adversarial_apply.1
$region0: #{adversarial_apply.1}
  #allocation0 [shape = 'u32[]', space=smem, size = 0x4, offset = 0x4, fixed_abs, tag = 'smem constant byte address 0x4 - core index']
  #allocation1 [shape = 'u32[144,128]{1,0:T(1,128)}', space=vmem, size = 0x12000, scoped, tag = 'internal scratch']
  %s0 = inlined_call_operand.vmem [shape: bf16[16,16], index: 0, kind: input, shape index: {}]
  %s1 = inlined_call_operand.vmem [shape: bf16[16,8], index: 1, kind: input, shape index: {}]
  %s2 = inlined_call_operand.vmem [shape: bf16[8,16], index: 2, kind: input, shape index: {}]
  %s3 = inlined_call_operand.vmem [shape: bf16[8,16], index: 3, kind: input, shape index: {}]
  %s4 = inlined_call_operand.hbm [shape: f32[256,128], index: 4, kind: input, shape index: {}]
  %s5 = inlined_call_operand.vmem [shape: f32[8,128], index: 5, kind: output, shape index: {}]
  %s6 = sld [smem:[#allocation0]]
  $region34: #{adversarial_apply.1} parent=0
    _
  %s8 = ssub.s32 1, %s6
  %s9 = scalar_select 0, %s8, %s6
  $region1: #{adversarial_apply.1} parent=0
    #allocation2 [shape = 'u8[131072]{0}', space=vmem, size = 0x20000, scoped, tag = 'input window, operand 4, single buffered']
    #allocation3 [shape = 's32[1]{0}', space=sflag, size = 0x4, scoped, tag = 'scoped memory for adversarial_apply.1']
    %10 = vsyncpa [#allocation3], 0
    // Predicated region
    $region2: #{adversarial_apply.1} parent=1 // pred_check
      _
    $region3: #{adversarial_apply.1} parent=1 // pred_check_branch
      %12 = sbr.rel (0) target = $region5
    $region4: #{adversarial_apply.1} parent=1 // pred_region
      _
    $region5: #{adversarial_apply.1} parent=1 // pred_fallthru
      _
    // Predicated region
    $region6: #{adversarial_apply.1} parent=1 // pred_check
      _
    $region7: #{adversarial_apply.1} parent=1 // pred_check_branch
      %14 = sbr.rel (0) target = $region9
    $region8: #{adversarial_apply.1} parent=1 // pred_region
      _
    $region9: #{adversarial_apply.1} parent=1 // pred_fallthru
      _
    // Predicated region
    $region10: #{adversarial_apply.1} parent=1 // pred_check
      _
    $region11: #{adversarial_apply.1} parent=1 // pred_check_branch
      %16 = sbr.rel (0) target = $region13
    $region12: #{adversarial_apply.1} parent=1 // pred_region
      _
    $region13: #{adversarial_apply.1} parent=1 // pred_fallthru
      _
    // Predicated region
    $region14: #{adversarial_apply.1} parent=1 // pred_check
      _
    $region15: #{adversarial_apply.1} parent=1 // pred_check_branch
      %18 = sbr.rel (0) target = $region17
    $region16: #{adversarial_apply.1} parent=1 // pred_region
      _
    $region17: #{adversarial_apply.1} parent=1 // pred_fallthru
      _
    // Predicated region
    $region18: #{adversarial_apply.1} parent=1 // pred_check
      _
    $region19: #{adversarial_apply.1} parent=1 // pred_check_branch
      %20 = sbr.rel (0) target = $region21
    $region20: #{adversarial_apply.1} parent=1 // pred_region
      %s22 = ssub.s32 4096, 4096
      %23 = vsyncadd [#allocation3], %s22
      %s24 = sshll.u32 [#allocation2], 4
      %s25 = int_to_ptr.vmem [resolvable:$true] %s24
      %30 = dma.hbm_to_vmem [thread:$0]  %s4, 4096, %s25, [#allocation3], 128, 128, 8
    $region21: #{adversarial_apply.1} parent=1 // pred_fallthru
      _
    // Predicated region
    $region22: #{adversarial_apply.1} parent=1 // pred_check
      _
    $region23: #{adversarial_apply.1} parent=1 // pred_check_branch
      %32 = sbr.rel (0) target = $region25
    $region24: #{adversarial_apply.1} parent=1 // pred_region
      %33 = dma.done [#allocation3], 4096
    $region25: #{adversarial_apply.1} parent=1 // pred_fallthru
      _
    %v35 = vld [vmem:[#allocation2] sm:$0xff]
    %v36 = vpack.c.bf16 %v35, %v35
    %v37 = vld [vmem:[%s1] sm:$0xf]
    %v38 = vld [vmem:[%s1 + $0x4] sm:$0xf]
    %v41 = vunpack.c.l.b16 %v37
    %v42 = vunpack.c.l.b16 %v38
    %v43 = vpack.c.b16 %v42, %v41
    %vm44 = vcmask 64512
    %v46 = vsel %vm44, %v43, 0
    %vm48 = vcmask 1043456
    %v50 = vsel %vm48, %v36, 0
    %52 = vmatprep.subr.bf16.mxu0 0
    %53 = vmatpush1.bf16.msra.mxu0 0
    %54 = vmatprep.subr.bf16.mxu0 0
    %55 = vmatpush1.bf16.msra.mxu0 0
    %56 = vmatprep.subr.bf16.mxu0 0
    %57 = vmatpush1.bf16.msra.mxu0 0
    %58 = vmatprep.subr.bf16.mxu0 0
    %59 = vmatpush1.bf16.msra.mxu0 0
    %60 = vmatprep.subr.bf16.mxu0 0
    %61 = vmatpush1.bf16.msra.mxu0 0
    %62 = vmatprep.subr.bf16.mxu0 0
    %63 = vmatpush1.bf16.msra.mxu0 0
    %64 = vmatprep.subr.bf16.mxu0 0
    %65 = vmatpush1.bf16.msra.mxu0 0
    %66 = vmatprep.subr.bf16.mxu0 0
    %67 = vmatpush1.bf16.msra.mxu0 %v50
    %68 = vmatprep.subr.bf16.mxu0 0
    %69 = vmatpush2.bf16.msra.mxu0 0
    %70 = vmatprep.subr.bf16.mxu0 0
    %71 = vmatpush2.bf16.msra.mxu0 0
    %72 = vmatprep.subr.bf16.mxu0 0
    %73 = vmatpush2.bf16.msra.mxu0 0
    %74 = vmatprep.subr.bf16.mxu0 0
    %75 = vmatpush2.bf16.msra.mxu0 0
    %76 = vmatprep.subr.bf16.mxu0 0
    %77 = vmatpush2.bf16.msra.mxu0 0
    %78 = vmatprep.subr.bf16.mxu0 0
    %79 = vmatpush2.bf16.msra.mxu0 0
    %80 = vmatprep.subr.bf16.mxu0 0
    %81 = vmatpush2.bf16.msra.mxu0 0
    %82 = vmatprep.subr.bf16.mxu0 0
    %83 = vmatpush2.bf16.msra.mxu0 0
    %84 = vmatprep.mubr.bf16.mxu0 0
    %85 = vmatmul.mubr.bf16.gmra.mxu0 %v46
    %v86 = vpop.f32.mrf.mxu0
    %v87 = vadd.f32 0.0, %v86
    %v88 = vpop.f32.mrf.mxu0
    %v89 = vpop.f32.mrf.mxu0
    %v90 = vadd.f32 0.0, %v89
    %v91 = vpop.f32.mrf.mxu0
    %92 = vdwg.mxu0
    %v93 = vld [vmem:[%s0] sm:$0xf]
    %v94 = vld [vmem:[%s0 + $0x4] sm:$0xf]
    %v95 = vpack.c.bf16 %v90, %v87
    %v96 = vld [vmem:[#allocation2 + $0x48] sm:$0x1]
    %v97 = vlaneseq
    %v98 = vshrl.u32 %v97, 7
    %v99 = vsub.s32 0, %v98
    %v100 = vrot.slane %v96, %v99
    %v103 = vunpack.c.l.b16 %v93
    %v104 = vunpack.c.l.b16 %v94
    %v105 = vpack.c.b16 %v104, %v103
    %vm106 = vcmask 130048
    %v108 = vsel %vm106, %v105, 0
    %110 = vmatprep.subr.bf16.mxu0 0
    %111 = vmatpush1.bf16.msra.mxu0 0
    %112 = vmatprep.subr.bf16.mxu0 0
    %113 = vmatpush1.bf16.msra.mxu0 0
    %114 = vmatprep.subr.bf16.mxu0 0
    %115 = vmatpush1.bf16.msra.mxu0 0
    %116 = vmatprep.subr.bf16.mxu0 0
    %117 = vmatpush1.bf16.msra.mxu0 0
    %118 = vmatprep.subr.bf16.mxu0 0
    %119 = vmatpush1.bf16.msra.mxu0 0
    %120 = vmatprep.subr.bf16.mxu0 0
    %121 = vmatpush1.bf16.msra.mxu0 0
    %122 = vmatprep.subr.bf16.mxu0 0
    %123 = vmatpush1.bf16.msra.mxu0 0
    %124 = vmatprep.subr.bf16.mxu0 0
    %125 = vmatpush1.bf16.msra.mxu0 %v95
    %126 = vmatprep.subr.bf16.mxu0 0
    %127 = vmatpush2.bf16.msra.mxu0 0
    %128 = vmatprep.subr.bf16.mxu0 0
    %129 = vmatpush2.bf16.msra.mxu0 0
    %130 = vmatprep.subr.bf16.mxu0 0
    %131 = vmatpush2.bf16.msra.mxu0 0
    %132 = vmatprep.subr.bf16.mxu0 0
    %133 = vmatpush2.bf16.msra.mxu0 0
    %134 = vmatprep.subr.bf16.mxu0 0
    %135 = vmatpush2.bf16.msra.mxu0 0
    %136 = vmatprep.subr.bf16.mxu0 0
    %137 = vmatpush2.bf16.msra.mxu0 0
    %138 = vmatprep.subr.bf16.mxu0 0
    %139 = vmatpush2.bf16.msra.mxu0 0
    %140 = vmatprep.subr.bf16.mxu0 0
    %141 = vmatpush2.bf16.msra.mxu0 0
    %142 = vmatprep.mubr.bf16.mxu0 0
    %143 = vmatmul.mubr.bf16.gmra.mxu0 %v108
    %v144 = vpop.f32.mrf.mxu0
    %v145 = vadd.f32 %v100, %v144
    %v146 = vpop.f32.mrf.mxu0
    %v147 = vpop.f32.mrf.mxu0
    %v148 = vadd.f32 %v100, %v147
    %v149 = vpop.f32.mrf.mxu0
    %150 = vdwg.mxu0
    %v151 = vmax.f32 %v145, 0.0
    %v152 = vmax.f32 %v148, 0.0
    %v153 = vld [vmem:[#allocation2 + $0x8] sm:$0xff]
    %v154 = vld [vmem:[#allocation2 + $0x10] sm:$0xff]
    %v155 = vld [vmem:[#allocation2 + $0x18] sm:$0xff]
    %v156 = vld [vmem:[#allocation2 + $0x20] sm:$0xff]
    %v157 = vpack.c.bf16 %v154, %v153
    %v158 = vpack.c.bf16 %v156, %v155
    %v159 = vpack.c.bf16 %v152, %v151
    %vm160 = vcmask 261120
    %v162 = vsel %vm160, %v159, 0
    %164 = vmatprep.subr.bf16.mxu0 0
    %165 = vmatpush1.bf16.msra.mxu0 0
    %166 = vmatprep.subr.bf16.mxu0 0
    %167 = vmatpush1.bf16.msra.mxu0 0
    %168 = vmatprep.subr.bf16.mxu0 0
    %169 = vmatpush1.bf16.msra.mxu0 0
    %170 = vmatprep.subr.bf16.mxu0 0
    %171 = vmatpush1.bf16.msra.mxu0 0
    %172 = vmatprep.subr.bf16.mxu0 0
    %173 = vmatpush1.bf16.msra.mxu0 0
    %174 = vmatprep.subr.bf16.mxu0 0
    %175 = vmatpush1.bf16.msra.mxu0 0
    %176 = vmatprep.subr.bf16.mxu0 0
    %177 = vmatpush1.bf16.msra.mxu0 %v158
    %178 = vmatprep.subr.bf16.mxu0 0
    %179 = vmatpush1.bf16.msra.mxu0 %v157
    %180 = vmatprep.subr.bf16.mxu0 0
    %181 = vmatpush2.bf16.msra.mxu0 0
    %182 = vmatprep.subr.bf16.mxu0 0
    %183 = vmatpush2.bf16.msra.mxu0 0
    %184 = vmatprep.subr.bf16.mxu0 0
    %185 = vmatpush2.bf16.msra.mxu0 0
    %186 = vmatprep.subr.bf16.mxu0 0
    %187 = vmatpush2.bf16.msra.mxu0 0
    %188 = vmatprep.subr.bf16.mxu0 0
    %189 = vmatpush2.bf16.msra.mxu0 0
    %190 = vmatprep.subr.bf16.mxu0 0
    %191 = vmatpush2.bf16.msra.mxu0 0
    %192 = vmatprep.subr.bf16.mxu0 0
    %193 = vmatpush2.bf16.msra.mxu0 0
    %194 = vmatprep.subr.bf16.mxu0 0
    %195 = vmatpush2.bf16.msra.mxu0 0
    %196 = vmatprep.mubr.bf16.mxu0 0
    %197 = vmatmul.mubr.bf16.gmra.mxu0 %v162
    %v198 = vpop.f32.mrf.mxu0
    %v199 = vadd.f32 0.0, %v198
    %v200 = vpop.f32.mrf.mxu0
    %v201 = vpop.f32.mrf.mxu0
    %v202 = vadd.f32 0.0, %v201
    %v203 = vpop.f32.mrf.mxu0
    %204 = vdwg.mxu0
    %v205 = vpack.c.bf16 %v202, %v199
    %v206 = vld [vmem:[#allocation2 + $0x49] sm:$0x1]
    %v207 = vld [vmem:[%s2] sm:$0xf]
    %v208 = vlaneseq
    %v209 = vshrl.u32 %v208, 7
    %v210 = vsub.s32 0, %v209
    %v211 = vrot.slane %v206, %v210
    %v213 = vsel %vm106, %v207, 0
    %215 = vmatprep.subr.bf16.mxu0 0
    %216 = vmatpush1.bf16.msra.mxu0 0
    %217 = vmatprep.subr.bf16.mxu0 0
    %218 = vmatpush1.bf16.msra.mxu0 0
    %219 = vmatprep.subr.bf16.mxu0 0
    %220 = vmatpush1.bf16.msra.mxu0 0
    %221 = vmatprep.subr.bf16.mxu0 0
    %222 = vmatpush1.bf16.msra.mxu0 0
    %223 = vmatprep.subr.bf16.mxu0 0
    %224 = vmatpush1.bf16.msra.mxu0 0
    %225 = vmatprep.subr.bf16.mxu0 0
    %226 = vmatpush1.bf16.msra.mxu0 0
    %227 = vmatprep.subr.bf16.mxu0 0
    %228 = vmatpush1.bf16.msra.mxu0 0
    %229 = vmatprep.subr.bf16.mxu0 0
    %230 = vmatpush1.bf16.msra.mxu0 %v205
    %231 = vmatprep.subr.bf16.mxu0 0
    %232 = vmatpush2.bf16.msra.mxu0 0
    %233 = vmatprep.subr.bf16.mxu0 0
    %234 = vmatpush2.bf16.msra.mxu0 0
    %235 = vmatprep.subr.bf16.mxu0 0
    %236 = vmatpush2.bf16.msra.mxu0 0
    %237 = vmatprep.subr.bf16.mxu0 0
    %238 = vmatpush2.bf16.msra.mxu0 0
    %239 = vmatprep.subr.bf16.mxu0 0
    %240 = vmatpush2.bf16.msra.mxu0 0
    %241 = vmatprep.subr.bf16.mxu0 0
    %242 = vmatpush2.bf16.msra.mxu0 0
    %243 = vmatprep.subr.bf16.mxu0 0
    %244 = vmatpush2.bf16.msra.mxu0 0
    %245 = vmatprep.subr.bf16.mxu0 0
    %246 = vmatpush2.bf16.msra.mxu0 0
    %247 = vmatprep.mubr.bf16.mxu0 0
    %248 = vmatmul.mubr.bf16.gmra.mxu0 %v213
    %v249 = vpop.f32.mrf.mxu0
    %v250 = vadd.f32 %v211, %v249
    %v251 = vpop.f32.mrf.mxu0
    %v252 = vpop.f32.mrf.mxu0
    %v253 = vpop.f32.mrf.mxu0
    %254 = vdwg.mxu0
    %v255 = vld [vmem:[%s3] sm:$0xf]
    %v257 = vsel %vm106, %v255, 0
    %259 = vmatprep.subr.bf16.mxu0 0
    %260 = vmatpush1.bf16.msra.mxu0 0
    %261 = vmatprep.subr.bf16.mxu0 0
    %262 = vmatpush1.bf16.msra.mxu0 0
    %263 = vmatprep.subr.bf16.mxu0 0
    %264 = vmatpush1.bf16.msra.mxu0 0
    %265 = vmatprep.subr.bf16.mxu0 0
    %266 = vmatpush1.bf16.msra.mxu0 0
    %267 = vmatprep.subr.bf16.mxu0 0
    %268 = vmatpush1.bf16.msra.mxu0 0
    %269 = vmatprep.subr.bf16.mxu0 0
    %270 = vmatpush1.bf16.msra.mxu0 0
    %271 = vmatprep.subr.bf16.mxu0 0
    %272 = vmatpush1.bf16.msra.mxu0 0
    %273 = vmatprep.subr.bf16.mxu0 0
    %274 = vmatpush1.bf16.msra.mxu0 %v205
    %275 = vmatprep.subr.bf16.mxu0 0
    %276 = vmatpush2.bf16.msra.mxu0 0
    %277 = vmatprep.subr.bf16.mxu0 0
    %278 = vmatpush2.bf16.msra.mxu0 0
    %279 = vmatprep.subr.bf16.mxu0 0
    %280 = vmatpush2.bf16.msra.mxu0 0
    %281 = vmatprep.subr.bf16.mxu0 0
    %282 = vmatpush2.bf16.msra.mxu0 0
    %283 = vmatprep.subr.bf16.mxu0 0
    %284 = vmatpush2.bf16.msra.mxu0 0
    %285 = vmatprep.subr.bf16.mxu0 0
    %286 = vmatpush2.bf16.msra.mxu0 0
    %287 = vmatprep.subr.bf16.mxu0 0
    %288 = vmatpush2.bf16.msra.mxu0 0
    %289 = vmatprep.subr.bf16.mxu0 0
    %290 = vmatpush2.bf16.msra.mxu0 0
    %291 = vmatprep.mubr.bf16.mxu0 0
    %292 = vmatmul.mubr.bf16.gmra.mxu0 %v257
    %v293 = vpop.f32.mrf.mxu0
    %v294 = vadd.f32 %v211, %v293
    %v295 = vpop.f32.mrf.mxu0
    %v296 = vpop.f32.mrf.mxu0
    %v297 = vpop.f32.mrf.mxu0
    %298 = vdwg.mxu0
    %v299 = vld [vmem:[#allocation2 + $0x28] sm:$0xff]
    %v300 = vld [vmem:[#allocation2 + $0x30] sm:$0xff]
    %v301 = vpack.c.bf16 %v300, %v299
    %v302 = vld [vmem:[#allocation2 + $0x38] sm:$0xff]
    %v303 = vld [vmem:[#allocation2 + $0x40] sm:$0xff]
    %v304 = vpack.c.bf16 %v303, %v302
    %v305 = vpack.c.bf16 %v250, %v250
    %v306 = vpack.c.bf16 %v294, %v294
    %v308 = vsel %vm106, %v306, 0
    %310 = vmatprep.subr.bf16.mxu0 0
    %311 = vmatpush1.bf16.msra.mxu0 0
    %312 = vmatprep.subr.bf16.mxu0 0
    %313 = vmatpush1.bf16.msra.mxu0 0
    %314 = vmatprep.subr.bf16.mxu0 0
    %315 = vmatpush1.bf16.msra.mxu0 0
    %316 = vmatprep.subr.bf16.mxu0 0
    %317 = vmatpush1.bf16.msra.mxu0 0
    %318 = vmatprep.subr.bf16.mxu0 0
    %319 = vmatpush1.bf16.msra.mxu0 0
    %320 = vmatprep.subr.bf16.mxu0 0
    %321 = vmatpush1.bf16.msra.mxu0 0
    %322 = vmatprep.subr.bf16.mxu0 0
    %323 = vmatpush1.bf16.msra.mxu0 0
    %324 = vmatprep.subr.bf16.mxu0 0
    %325 = vmatpush1.bf16.msra.mxu0 %v304
    %326 = vmatprep.subr.bf16.mxu0 0
    %327 = vmatpush2.bf16.msra.mxu0 0
    %328 = vmatprep.subr.bf16.mxu0 0
    %329 = vmatpush2.bf16.msra.mxu0 0
    %330 = vmatprep.subr.bf16.mxu0 0
    %331 = vmatpush2.bf16.msra.mxu0 0
    %332 = vmatprep.subr.bf16.mxu0 0
    %333 = vmatpush2.bf16.msra.mxu0 0
    %334 = vmatprep.subr.bf16.mxu0 0
    %335 = vmatpush2.bf16.msra.mxu0 0
    %336 = vmatprep.subr.bf16.mxu0 0
    %337 = vmatpush2.bf16.msra.mxu0 0
    %338 = vmatprep.subr.bf16.mxu0 0
    %339 = vmatpush2.bf16.msra.mxu0 0
    %340 = vmatprep.subr.bf16.mxu0 0
    %341 = vmatpush2.bf16.msra.mxu0 0
    %342 = vmatprep.mubr.bf16.mxu0 0
    %343 = vmatmul.mubr.bf16.gmra.mxu0 %v308
    %v344 = vpop.f32.mrf.mxu0
    %v345 = vadd.f32 0.0, %v344
    %v346 = vpop.f32.mrf.mxu0
    %v347 = vpop.f32.mrf.mxu0
    %v348 = vpop.f32.mrf.mxu0
    %349 = vdwg.mxu0
    %v351 = vsel %vm106, %v305, 0
    %353 = vmatprep.subr.bf16.mxu0 0
    %354 = vmatpush1.bf16.msra.mxu0 0
    %355 = vmatprep.subr.bf16.mxu0 0
    %356 = vmatpush1.bf16.msra.mxu0 0
    %357 = vmatprep.subr.bf16.mxu0 0
    %358 = vmatpush1.bf16.msra.mxu0 0
    %359 = vmatprep.subr.bf16.mxu0 0
    %360 = vmatpush1.bf16.msra.mxu0 0
    %361 = vmatprep.subr.bf16.mxu0 0
    %362 = vmatpush1.bf16.msra.mxu0 0
    %363 = vmatprep.subr.bf16.mxu0 0
    %364 = vmatpush1.bf16.msra.mxu0 0
    %365 = vmatprep.subr.bf16.mxu0 0
    %366 = vmatpush1.bf16.msra.mxu0 0
    %367 = vmatprep.subr.bf16.mxu0 0
    %368 = vmatpush1.bf16.msra.mxu0 %v301
    %369 = vmatprep.subr.bf16.mxu0 0
    %370 = vmatpush2.bf16.msra.mxu0 0
    %371 = vmatprep.subr.bf16.mxu0 0
    %372 = vmatpush2.bf16.msra.mxu0 0
    %373 = vmatprep.subr.bf16.mxu0 0
    %374 = vmatpush2.bf16.msra.mxu0 0
    %375 = vmatprep.subr.bf16.mxu0 0
    %376 = vmatpush2.bf16.msra.mxu0 0
    %377 = vmatprep.subr.bf16.mxu0 0
    %378 = vmatpush2.bf16.msra.mxu0 0
    %379 = vmatprep.subr.bf16.mxu0 0
    %380 = vmatpush2.bf16.msra.mxu0 0
    %381 = vmatprep.subr.bf16.mxu0 0
    %382 = vmatpush2.bf16.msra.mxu0 0
    %383 = vmatprep.subr.bf16.mxu0 0
    %384 = vmatpush2.bf16.msra.mxu0 0
    %385 = vmatprep.mubr.bf16.mxu0 0
    %386 = vmatmul.mubr.bf16.gmra.mxu0 %v351
    %v387 = vpop.f32.mrf.mxu0
    %v388 = vadd.f32 %v345, %v387
    %v389 = vpop.f32.mrf.mxu0
    %v390 = vpop.f32.mrf.mxu0
    %v391 = vpop.f32.mrf.mxu0
    %392 = vdwg.mxu0
    %v393 = vld [vmem:[#allocation2 + $0x4a] sm:$0x1]
    %v394 = vlaneseq
    %v395 = vshrl.u32 %v394, 7
    %v396 = vsub.s32 0, %v395
    %v397 = vrot.slane %v393, %v396
    %v398 = vadd.f32 %v388, %v397
    %v399 = vlaneseq
    %v400 = vand.u32 %v399, 127
    %vm401 = vcmp.lt.s32.totalorder %v400, 32
    %v402 = vmax.f32 %v398, 0.0
    %v403 = vsel %vm401, %v402, %v398
    %v404 = vld [vmem:[#allocation2 + $0x50] sm:$0xff]
    %v405 = vld [vmem:[#allocation2 + $0x58] sm:$0xff]
    %v406 = vld [vmem:[#allocation2 + $0x60] sm:$0xff]
    %v407 = vld [vmem:[#allocation2 + $0x68] sm:$0xff]
    %v408 = vld [vmem:[#allocation2 + $0x70] sm:$0x3]
    %v409 = vpack.c.bf16 %v405, %v404
    %v410 = vpack.c.bf16 %v407, %v406
    %v411 = vpack.c.bf16 %v408, %v408
    %v412 = vpack.c.bf16 %v403, %v403
    %v413 = vld [vmem:[#allocation2 + $0x4b] sm:$0x1]
    %v414 = vlaneseq
    %v415 = vshrl.u32 %v414, 7
    %v416 = vsub.s32 0, %v415
    %v417 = vrot.slane %v413, %v416
    %vm418 = vcmask 277504
    %v420 = vsel %vm418, %v412, 0
    %vm422 = vcmask 1040384
    %v424 = vsel %vm422, %v411, 0
    %426 = vmatprep.subr.bf16.mxu0 0
    %427 = vmatpush1.bf16.msra.mxu0 0
    %428 = vmatprep.subr.bf16.mxu0 0
    %429 = vmatpush1.bf16.msra.mxu0 0
    %430 = vmatprep.subr.bf16.mxu0 0
    %431 = vmatpush1.bf16.msra.mxu0 0
    %432 = vmatprep.subr.bf16.mxu0 0
    %433 = vmatpush1.bf16.msra.mxu0 0
    %434 = vmatprep.subr.bf16.mxu0 0
    %435 = vmatpush1.bf16.msra.mxu0 0
    %436 = vmatprep.subr.bf16.mxu0 0
    %437 = vmatpush1.bf16.msra.mxu0 %v424
    %438 = vmatprep.subr.bf16.mxu0 0
    %439 = vmatpush1.bf16.msra.mxu0 %v410
    %440 = vmatprep.subr.bf16.mxu0 0
    %441 = vmatpush1.bf16.msra.mxu0 %v409
    %442 = vmatprep.subr.bf16.mxu0 0
    %443 = vmatpush2.bf16.msra.mxu0 0
    %444 = vmatprep.subr.bf16.mxu0 0
    %445 = vmatpush2.bf16.msra.mxu0 0
    %446 = vmatprep.subr.bf16.mxu0 0
    %447 = vmatpush2.bf16.msra.mxu0 0
    %448 = vmatprep.subr.bf16.mxu0 0
    %449 = vmatpush2.bf16.msra.mxu0 0
    %450 = vmatprep.subr.bf16.mxu0 0
    %451 = vmatpush2.bf16.msra.mxu0 0
    %452 = vmatprep.subr.bf16.mxu0 0
    %453 = vmatpush2.bf16.msra.mxu0 0
    %454 = vmatprep.subr.bf16.mxu0 0
    %455 = vmatpush2.bf16.msra.mxu0 0
    %456 = vmatprep.subr.bf16.mxu0 0
    %457 = vmatpush2.bf16.msra.mxu0 0
    %458 = vmatprep.mubr.bf16.mxu0 0
    %459 = vmatmul.mubr.bf16.gmra.mxu0 %v420
    %v460 = vpop.f32.mrf.mxu0
    %v461 = vadd.f32 %v417, %v460
    %v462 = vpop.f32.mrf.mxu0
    %v463 = vpop.f32.mrf.mxu0
    %v464 = vpop.f32.mrf.mxu0
    %465 = vdwg.mxu0
    %vm466 = vcmp.lt.s32.totalorder %v400, 2
    %v467 = vsel %vm466, %v461, -inf
    %468 = vmax.xlane.f32.xlu0 %v467
    %v469 = vpop.xlane.xlu0 %468
    %vm470 = vcmp.ge.s32.totalorder %v400, 2
    %vm471 = vcmp.lt.s32.totalorder %v400, 4
    %vm472 = vmand %vm470, %vm471
    %v473 = vsel %vm472, %v461, -inf
    %474 = vmax.xlane.f32.xlu0 %v473
    %v475 = vpop.xlane.xlu0 %474
    %vm476 = vcmp.ge.s32.totalorder %v400, 4
    %vm477 = vcmp.lt.s32.totalorder %v400, 8
    %vm478 = vmand %vm476, %vm477
    %v479 = vsel %vm478, %v461, -inf
    %480 = vmax.xlane.f32.xlu0 %v479
    %v481 = vpop.xlane.xlu0 %480
    %v482 = vsel %vm477, %v481, 0.0
    %v483 = vsel %vm471, %v475, %v482
    %v484 = vsel %vm466, %v469, %v483
    %v485 = vsub.f32 %v461, %v484
    %v486 = vmul.f32 %v485, 1.442695
    %v487 = vpow.pop %v486
    %v488 = vld [vmem:[#allocation2 + $0x80] sm:$0xff]
    %v489 = vld [vmem:[#allocation2 + $0x88] sm:$0xff]
    %v490 = vld [vmem:[#allocation2 + $0x90] sm:$0xff]
    %v491 = vld [vmem:[#allocation2 + $0x98] sm:$0xff]
    %v492 = vld [vmem:[#allocation2 + $0xa0] sm:$0xff]
    %v493 = vld [vmem:[#allocation2 + $0xa8] sm:$0xff]
    %v494 = vld [vmem:[#allocation2 + $0xb0] sm:$0xff]
    %v495 = vld [vmem:[#allocation2 + $0xb8] sm:$0xff]
    %v496 = vld [vmem:[#allocation2 + $0xc0] sm:$0xff]
    %v497 = vld [vmem:[#allocation2 + $0xc8] sm:$0xff]
    %v498 = vld [vmem:[#allocation2 + $0xd0] sm:$0xff]
    %v499 = vld [vmem:[#allocation2 + $0xd8] sm:$0xff]
    %v500 = vld [vmem:[#allocation2 + $0xe0] sm:$0xff]
    %v501 = vld [vmem:[#allocation2 + $0xe8] sm:$0xff]
    %v502 = vld [vmem:[#allocation2 + $0xf0] sm:$0xff]
    %v503 = vld [vmem:[#allocation2 + $0xf8] sm:$0xff]
    %504 = vmatprep.subr.mxu0 0.0
    %505 = vmatpush1.msra.mxu0 %v503
    %506 = vmatprep.subr.mxu0 0.0
    %507 = vmatpush1.msra.mxu0 %v502
    %508 = vmatprep.subr.mxu0 0.0
    %509 = vmatpush1.msra.mxu0 %v501
    %510 = vmatprep.subr.mxu0 0.0
    %511 = vmatpush1.msra.mxu0 %v500
    %512 = vmatprep.subr.mxu0 0.0
    %513 = vmatpush1.msra.mxu0 %v499
    %514 = vmatprep.subr.mxu0 0.0
    %515 = vmatpush1.msra.mxu0 %v498
    %516 = vmatprep.subr.mxu0 0.0
    %517 = vmatpush1.msra.mxu0 %v497
    %518 = vmatprep.subr.mxu0 0.0
    %519 = vmatpush1.msra.mxu0 %v496
    %520 = vmatprep.subr.mxu0 0.0
    %521 = vmatpush1.msra.mxu0 %v495
    %522 = vmatprep.subr.mxu0 0.0
    %523 = vmatpush1.msra.mxu0 %v494
    %524 = vmatprep.subr.mxu0 0.0
    %525 = vmatpush1.msra.mxu0 %v493
    %526 = vmatprep.subr.mxu0 0.0
    %527 = vmatpush1.msra.mxu0 %v492
    %528 = vmatprep.subr.mxu0 0.0
    %529 = vmatpush1.msra.mxu0 %v491
    %530 = vmatprep.subr.mxu0 0.0
    %531 = vmatpush1.msra.mxu0 %v490
    %532 = vmatprep.subr.mxu0 0.0
    %533 = vmatpush1.msra.mxu0 %v489
    %534 = vmatprep.subr.mxu0 0.0
    %535 = vmatpush1.msra.mxu0 %v488
    %536 = vmatprep.subr.mxu0 0.0
    %537 = vmatpush2.msra.mxu0 0.0
    %538 = vmatprep.subr.mxu0 0.0
    %539 = vmatpush2.msra.mxu0 0.0
    %540 = vmatprep.subr.mxu0 0.0
    %541 = vmatpush2.msra.mxu0 0.0
    %542 = vmatprep.subr.mxu0 0.0
    %543 = vmatpush2.msra.mxu0 0.0
    %544 = vmatprep.subr.mxu0 0.0
    %545 = vmatpush2.msra.mxu0 0.0
    %546 = vmatprep.subr.mxu0 0.0
    %547 = vmatpush2.msra.mxu0 0.0
    %548 = vmatprep.subr.mxu0 0.0
    %549 = vmatpush2.msra.mxu0 0.0
    %550 = vmatprep.subr.mxu0 0.0
    %551 = vmatpush2.msra.mxu0 0.0
    %552 = vmatprep.subr.mxu0 0.0
    %553 = vmatpush2.msra.mxu0 0.0
    %554 = vmatprep.subr.mxu0 0.0
    %555 = vmatpush2.msra.mxu0 0.0
    %556 = vmatprep.subr.mxu0 0.0
    %557 = vmatpush2.msra.mxu0 0.0
    %558 = vmatprep.subr.mxu0 0.0
    %559 = vmatpush2.msra.mxu0 0.0
    %560 = vmatprep.subr.mxu0 0.0
    %561 = vmatpush2.msra.mxu0 0.0
    %562 = vmatprep.subr.mxu0 0.0
    %563 = vmatpush2.msra.mxu0 0.0
    %564 = vmatprep.subr.mxu0 0.0
    %565 = vmatpush2.msra.mxu0 0.0
    %566 = vmatprep.subr.mxu0 0.0
    %567 = vmatpush2.msra.mxu0 0.0
    %568 = vmatprep.mubr.f32.mxu0 0.0
    %569 = vmatmul.mubr.f32.gmra.mxu0 %v487
    %v570 = vpop.f32.mrf.mxu0
    %v571 = vadd.f32 0.0, %v570
    %v572 = vpop.f32.mrf.mxu0
    %573 = vdwg.mxu0
    %v574 = vrcp.pop %v571
    %v575 = vmul.f32 %v487, %v574
    %576 = vst [vmem:[%s5] sm:$0xff] %v575
    // Predicated region
    $region26: #{adversarial_apply.1} parent=1 // pred_check
      _
    $region27: #{adversarial_apply.1} parent=1 // pred_check_branch
      %578 = sbr.rel (0) target = $region29
    $region28: #{adversarial_apply.1} parent=1 // pred_region
      _
    $region29: #{adversarial_apply.1} parent=1 // pred_fallthru
      _
    // Predicated region
    $region30: #{adversarial_apply.1} parent=1 // pred_check
      _
    $region31: #{adversarial_apply.1} parent=1 // pred_check_branch
      %580 = sbr.rel (0) target = $region33
    $region32: #{adversarial_apply.1} parent=1 // pred_region
      _
    $region33: #{adversarial_apply.1} parent=1 // pred_fallthru
      _
    %581 = vsyncpa [#allocation3], 1

</llo_original>
